<compile_context>
chip_gen: v7x
topology: tpu7x:2x2x1
jax: 0.10.0
libtpu: 0.0.40
codegen_flags: <defaults>
</compile_context>

<pallas_src>
import math
import functools

import jax
import jax.numpy as jnp
from jax.experimental import pallas as pl
from jax.experimental.pallas import tpu as pltpu


def _pick_block(n, target, align=1):
    """Largest divisor of n that is <= target, preferring multiples of `align`
    (then align//2, ..., then any divisor).  Never exceeds target when n > target
    (avoids silently blowing the VMEM limit for awkward n)."""
    if n <= target:
        return n
    a = align
    while a >= 1:
        start = (target // a) * a
        for cand in range(start, 0, -a):
            if n % cand == 0:
                return cand
        a //= 2
    return 1


# ---------------------------------------------------------------------------
# Dense linear kernel: (TM, Din) @ (Din, Dout) + bias, bf16 MXU, f32 accumulate.
# ---------------------------------------------------------------------------
def _linear_kernel(x_ref, w_ref, b_ref, o_ref):
    acc = jnp.dot(x_ref[...], w_ref[...], preferred_element_type=jnp.float32)
    o_ref[...] = (acc + b_ref[...]).astype(o_ref.dtype)


def _linear(x2d, w_t, b, out_dtype, *, row_block=256,
            vmem_limit=48 * 1024 * 1024):
    M, Din = x2d.shape
    Dout = w_t.shape[1]
    TM = _pick_block(M, row_block, align=16)     # 16-row alignment for bf16 packing
    grid = (M // TM,)

    in_bytes = (M * Din * x2d.dtype.itemsize
                + Din * Dout * w_t.dtype.itemsize + Dout * 4)
    out_bytes = M * Dout * jnp.dtype(out_dtype).itemsize
    cost = pl.CostEstimate(flops=2 * M * Din * Dout, transcendentals=0,
                           bytes_accessed=in_bytes + out_bytes)

    def build(single_buffer_weights):
        # Weight/bias index maps are constant across the grid; Buffered(1) keeps a
        # single resident VMEM copy (no second double-buffer copy of the weight).
        extra = {"pipeline_mode": pl.Buffered(1)} if single_buffer_weights else {}
        return pl.pallas_call(
            _linear_kernel,
            out_shape=jax.ShapeDtypeStruct((M, Dout), out_dtype),
            grid=grid,
            in_specs=[
                pl.BlockSpec((TM, Din), lambda r: (r, 0)),
                pl.BlockSpec((Din, Dout), lambda r: (0, 0), **extra),
                pl.BlockSpec((1, Dout), lambda r: (0, 0), **extra),
            ],
            out_specs=pl.BlockSpec((TM, Dout), lambda r: (r, 0)),
            compiler_params=pltpu.CompilerParams(
                dimension_semantics=("parallel",),
                vmem_limit_bytes=vmem_limit),
            cost_estimate=cost,
        )

    try:
        return build(True)(x2d, w_t, b)
    except Exception:
        # TODO(synk): pipeline_mode=pl.Buffered(1) unsupported on this jax version.
        return build(False)(x2d, w_t, b)


# ---------------------------------------------------------------------------
# Attention kernel: per (batch, head-group, query-block) step, all heads of the
# group contracted in one leading-batch einsum.  `fused=True` means the blocks
# arrive straight from the (B, S, H, dk) projection outputs (no HBM transposes);
# the head-major relayout then happens in VMEM via pltpu.einshape.
# ---------------------------------------------------------------------------
def _attention_kernel(q_ref, k_ref, v_ref, o_ref, *maybe_sc_ref,
                      scale, with_scores, fused, approx_recip):
    if fused:
        q = pltpu.einshape("qhd->hqd", q_ref[0])   # (HG, TQ, dk) bf16
        k = pltpu.einshape("khd->hkd", k_ref[0])   # (HG, S,  dk) bf16
        v = pltpu.einshape("khd->hkd", v_ref[0])   # (HG, S,  dk) bf16
    else:
        q, k, v = q_ref[0], k_ref[0], v_ref[0]     # already head-major

    # All heads of the group in one batched MXU contraction -> (HG, TQ, S) f32.
    s = jnp.einsum("hqd,hkd->hqk", q, k,
                   preferred_element_type=jnp.float32) * scale

    # Numerically stable softmax along keys, single live f32 temporary.
    s = jnp.exp(s - jnp.max(s, axis=-1, keepdims=True))
    denom = jnp.sum(s, axis=-1, keepdims=True)
    if approx_recip:
        p = (s * pl.reciprocal(denom, approx=True)).astype(v.dtype)   # bf16 probs
    else:
        p = (s / denom).astype(v.dtype)

    if with_scores:
        sc_ref = maybe_sc_ref[0]
        sc_ref[0] = p.astype(sc_ref.dtype)         # bf16 scores writeback

    # (HG, TQ, S) @ (HG, S, dk) -> (HG, TQ, dk); bf16 MXU inputs, f32 accumulate.
    o = jnp.einsum("hqk,hkd->hqd", p, v,
                   preferred_element_type=jnp.float32).astype(o_ref.dtype)
    if fused:
        o_ref[0] = pltpu.einshape("hqd->qhd", o)   # store (TQ, HG, dk): head merge fused
    else:
        o_ref[0] = o


def _attention(qh, kh, vh, *, scale, with_scores, q_block, head_block, fused,
               approx_recip=True, vmem_limit=48 * 1024 * 1024):
    if fused:
        B, S, H, dk = qh.shape        # (B, S, H, dk) layout straight from projections
    else:
        B, H, S, dk = qh.shape        # classic head-major layout
    TQ, HG = q_block, head_block
    assert S % TQ == 0 and H % HG == 0
    G = H // HG

    # Put the larger of (batch, head-group) parallel axes outermost so both v7x
    # TensorCores stay busy even when B == 1.  q-block axis stays innermost and
    # "arbitrary" so the full-S K/V block remains resident across q blocks.
    swap = G > B
    grid = (G, B, S // TQ) if swap else (B, G, S // TQ)

    def _bgi(a0, a1, i):
        return (a1, a0, i) if swap else (a0, a1, i)

    if fused:
        def q_map(a0, a1, i):
            b, g, qi = _bgi(a0, a1, i)
            return (b, qi, g, 0)

        def kv_map(a0, a1, i):
            b, g, qi = _bgi(a0, a1, i)
            return (b, 0, g, 0)

        q_spec = pl.BlockSpec((1, TQ, HG, dk), q_map)
        kv_spec = pl.BlockSpec((1, S, HG, dk), kv_map)
        o_spec = pl.BlockSpec((1, TQ, HG, dk), q_map)
        o_shape = jax.ShapeDtypeStruct((B, S, H, dk), qh.dtype)    # bf16 output
    else:
        def q_map(a0, a1, i):
            b, g, qi = _bgi(a0, a1, i)
            return (b, g, qi, 0)

        def kv_map(a0, a1, i):
            b, g, qi = _bgi(a0, a1, i)
            return (b, g, 0, 0)

        q_spec = pl.BlockSpec((1, HG, TQ, dk), q_map)
        kv_spec = pl.BlockSpec((1, HG, S, dk), kv_map)
        o_spec = pl.BlockSpec((1, HG, TQ, dk), q_map)
        o_shape = jax.ShapeDtypeStruct((B, H, S, dk), qh.dtype)    # bf16 output

    def sc_map(a0, a1, i):
        b, g, qi = _bgi(a0, a1, i)
        return (b, g, qi, 0)

    out_shape = [o_shape]
    out_specs = [o_spec]
    if with_scores:
        out_shape.append(jax.ShapeDtypeStruct((B, H, S, S), qh.dtype))  # bf16 scores
        out_specs.append(pl.BlockSpec((1, HG, TQ, S), sc_map))

    elt = qh.dtype.itemsize
    bytes_accessed = 4 * B * S * H * dk * elt
    if with_scores:
        bytes_accessed += B * H * S * S * elt

    res = pl.pallas_call(
        functools.partial(_attention_kernel, scale=scale,
                          with_scores=with_scores, fused=fused,
                          approx_recip=approx_recip),
        out_shape=tuple(out_shape),
        grid=grid,
        in_specs=[q_spec, kv_spec, kv_spec],
        out_specs=tuple(out_specs),
        compiler_params=pltpu.CompilerParams(
            dimension_semantics=("parallel", "parallel", "arbitrary"),
            vmem_limit_bytes=vmem_limit),
        cost_estimate=pl.CostEstimate(
            flops=4 * B * H * S * S * dk,
            transcendentals=B * H * S * S,
            bytes_accessed=bytes_accessed),
    )(qh, kh, vh)

    if with_scores:
        return res[0], res[1]
    return res[0], None


# ---------------------------------------------------------------------------
# Module forward
# ---------------------------------------------------------------------------
def multi_head_attention(q, k, v, params, heads, *, return_attn=True,
                         q_block=None, head_block=None,
                         approx_softmax_recip=True,
                         attn_vmem_limit_bytes=48 * 1024 * 1024,
                         linear_vmem_limit_bytes=48 * 1024 * 1024,
                         linear_row_block=256):
    """MultiHeadAttention forward (eval mode, mask=None).

    params: dict wq,bq,wk,bk,wv,bv,wo,bo with weights in PyTorch (out,in) layout.
    Returns (output, [att, scores]) like the torch module (att/scores in bf16),
    or (output, None) if return_attn=False (drops the B*H*S^2 scores writeback).
    For v6e/v5e (128 MiB VMEM) larger tiles / vmem limits can be passed in;
    defaults are sized for v7x's 64 MiB VMEM.
    """
    B, S, D = q.shape
    assert D % heads == 0
    dk = D // heads
    compute = jnp.bfloat16            # MXU input dtype; accumulation stays f32

    wq_t = params["wq"].T.astype(compute)
    wk_t = params["wk"].T.astype(compute)
    wv_t = params["wv"].T.astype(compute)
    wo_t = params["wo"].T.astype(compute)
    bq = params["bq"].reshape(1, D).astype(jnp.float32)
    bk = params["bk"].reshape(1, D).astype(jnp.float32)
    bv = params["bv"].reshape(1, D).astype(jnp.float32)
    bo = params["bo"].reshape(1, D).astype(jnp.float32)

    # Projections: fold batch into the row dimension -> dense lane-wide GEMMs.
    qp = _linear(q.reshape(B * S, D).astype(compute), wq_t, bq, compute,
                 row_block=linear_row_block, vmem_limit=linear_vmem_limit_bytes)
    kp = _linear(k.reshape(B * S, D).astype(compute), wk_t, bk, compute,
                 row_block=linear_row_block, vmem_limit=linear_vmem_limit_bytes)
    vp = _linear(v.reshape(B * S, D).astype(compute), wv_t, bv, compute,
                 row_block=linear_row_block, vmem_limit=linear_vmem_limit_bytes)

    # Free (B, S, H, dk) views -- no HBM transpose passes before attention.
    qp4 = qp.reshape(B, S, heads, dk)
    kp4 = kp.reshape(B, S, heads, dk)
    vp4 = vp.reshape(B, S, heads, dk)

    TQ = q_block if q_block is not None else _pick_block(S, 256, align=16)
    if head_block is not None:
        HG = head_block
    elif heads <= 8:
        HG = heads          # head-group dim must equal H or be a multiple of 8
    elif heads % 8 == 0:
        HG = 8              # small head groups bound the v7x VMEM working set
    else:
        HG = heads
    scale = 1.0 / math.sqrt(dk)

    try:
        o4, scores = _attention(
            qp4, kp4, vp4, scale=scale, with_scores=return_attn,
            q_block=TQ, head_block=HG, fused=True,
            approx_recip=approx_softmax_recip, vmem_limit=attn_vmem_limit_bytes)
        att = o4.reshape(B, S, D)                        # head merge: free reshape
    except Exception:
        # TODO(synk): fallback with XLA-side head transposes for Mosaic versions
        # that reject the in-kernel (seq,head,dk)<->(head,seq,dk) relayout.
        tr = lambda x: x.transpose(0, 2, 1, 3)
        o4, scores = _attention(
            tr(qp4), tr(kp4), tr(vp4), scale=scale, with_scores=return_attn,
            q_block=TQ, head_block=HG, fused=False,
            approx_recip=approx_softmax_recip, vmem_limit=attn_vmem_limit_bytes)
        att = o4.transpose(0, 2, 1, 3).reshape(B, S, D)

    # att is already bf16 -> feeds the out-projection with no extra cast pass.
    out2 = _linear(att.reshape(B * S, D), wo_t, bo, jnp.float32,
                   row_block=linear_row_block, vmem_limit=linear_vmem_limit_bytes)
    output = out2.reshape(B, S, D)

    if return_attn:
        return output, [att, scores]
    return output, None


# ---------------------------------------------------------------------------
# Pure-JAX reference mirroring the PyTorch forward (eval mode), f32 throughout.
# ---------------------------------------------------------------------------
def _reference(q, k, v, params, heads):
    bs, S, D = q.shape
    dk = D // heads

    def lin(x, w, b):
        return x @ w.T + b

    qp = lin(q, params["wq"], params["bq"]).reshape(bs, S, heads, dk).transpose(0, 2, 1, 3)
    kp = lin(k, params["wk"], params["bk"]).reshape(bs, S, heads, dk).transpose(0, 2, 1, 3)
    vp = lin(v, params["wv"], params["bv"]).reshape(bs, S, heads, dk).transpose(0, 2, 1, 3)

    scores = jnp.einsum("bhqd,bhkd->bhqk", qp, kp) / math.sqrt(dk)
    scores = jax.nn.softmax(scores, axis=-1)
    out = jnp.einsum("bhqk,bhkd->bhqd", scores, vp)
    att = out.transpose(0, 2, 1, 3).reshape(bs, S, D)
    output = lin(att, params["wo"], params["bo"])
    return output, [att, scores]


if __name__ == "__main__":
    # Small shapes consistent with the module: batch=2, seq=8, d_model=32, heads=4.
    bs, S, D, H = 2, 8, 32, 4
    key = jax.random.PRNGKey(0)
    keys = jax.random.split(key, 12)

    bound = 1.0 / math.sqrt(D)   # nn.Linear default init range
    params = {
        "wq": jax.random.uniform(keys[0], (D, D), jnp.float32, -bound, bound),
        "bq": jax.random.uniform(keys[1], (D,), jnp.float32, -bound, bound),
        "wk": jax.random.uniform(keys[2], (D, D), jnp.float32, -bound, bound),
        "bk": jax.random.uniform(keys[3], (D,), jnp.float32, -bound, bound),
        "wv": jax.random.uniform(keys[4], (D, D), jnp.float32, -bound, bound),
        "bv": jax.random.uniform(keys[5], (D,), jnp.float32, -bound, bound),
        "wo": jax.random.uniform(keys[6], (D, D), jnp.float32, -bound, bound),
        "bo": jax.random.uniform(keys[7], (D,), jnp.float32, -bound, bound),
    }

    q = jax.random.normal(keys[8], (bs, S, D), jnp.float32)
    k = jax.random.normal(keys[9], (bs, S, D), jnp.float32)
    v = jax.random.normal(keys[10], (bs, S, D), jnp.float32)

    output, (att, scores) = multi_head_attention(q, k, v, params, H)
    jax.block_until_ready((output, att, scores))

    ref_out, (ref_att, ref_scores) = _reference(q, k, v, params, H)
    # bf16 MXU inputs / bf16 att+scores, f32 accumulation -> mixed-precision tolerance.
    assert jnp.allclose(output, ref_out, atol=3e-2, rtol=3e-2)
    assert jnp.allclose(att.astype(jnp.float32), ref_att, atol=3e-2, rtol=3e-2)
    assert jnp.allclose(scores.astype(jnp.float32), ref_scores, atol=3e-2, rtol=3e-2)

    print("KERNEL_OK")
</pallas_src>

<mosaic_0001>
module attributes {stable_mosaic.version = 11 : i64} {
  func.func @_linear_kernel(%arg0: i32, %arg1: memref<16x32xbf16, #tpu.memory_space<vmem>>, %arg2: memref<32x32xbf16, #tpu.memory_space<vmem>>, %arg3: memref<1x32xf32, #tpu.memory_space<vmem>>, %arg4: memref<16x32xbf16, #tpu.memory_space<vmem>>) attributes {dimension_semantics = [#tpu.dimension_semantics<parallel>], iteration_bounds = array<i64: 1>, scalar_prefetch = 0 : i64, scratch_operands = 0 : i64, tpu.core_type = #tpu.core_type<tc>, window_params = [{transform_indices = @transform_0, window_bounds = array<i64: 16, 32>}, {pipeline_mode = #tpu.pipeline_mode<synchronous>, transform_indices = @transform_1, window_bounds = array<i64: 32, 32>}, {pipeline_mode = #tpu.pipeline_mode<synchronous>, transform_indices = @transform_2, window_bounds = array<i64: 1, 32>}, {transform_indices = @transform_3, window_bounds = array<i64: 16, 32>}]} {
    %c0 = arith.constant 0 : index
    %c0_0 = arith.constant 0 : index
    %0 = vector.load %arg1[%c0, %c0_0] : memref<16x32xbf16, #tpu.memory_space<vmem>>, vector<16x32xbf16>
    %c0_1 = arith.constant 0 : index
    %c0_2 = arith.constant 0 : index
    %1 = vector.load %arg2[%c0_1, %c0_2] : memref<32x32xbf16, #tpu.memory_space<vmem>>, vector<32x32xbf16>
    %cst = arith.constant dense<0.000000e+00> : vector<16x32xf32>
    %2 = tpu.matmul %0, %1, %cst {dimension_numbers = #tpu.dot_dimension_numbers<[1], [0], [0], [1], [0, 0, 1, 1], [], []>} : vector<16x32xbf16>, vector<32x32xbf16>, vector<16x32xf32> -> vector<16x32xf32>
    %c0_3 = arith.constant 0 : index
    %c0_4 = arith.constant 0 : index
    %3 = vector.load %arg3[%c0_3, %c0_4] : memref<1x32xf32, #tpu.memory_space<vmem>>, vector<1x32xf32>
    %4 = vector.broadcast %3 : vector<1x32xf32> to vector<16x32xf32>
    %5 = arith.addf %2, %4 : vector<16x32xf32>
    %6 = arith.truncf %5 : vector<16x32xf32> to vector<16x32xbf16>
    %c0_5 = arith.constant 0 : index
    %c0_6 = arith.constant 0 : index
    %7 = vector.load %arg4[%c0_5, %c0_6] : memref<16x32xbf16, #tpu.memory_space<vmem>>, vector<16x32xbf16>
    tpu.vector_store %arg4[%c0_5, %c0_6], %6 {strides = array<i32>} : memref<16x32xbf16, #tpu.memory_space<vmem>>, vector<16x32xbf16>,
    return
  }
  func.func @transform_0(%arg0: i32) -> (i32, i32) {
    %c0_i32 = arith.constant 0 : i32
    %c0_i32_0 = arith.constant 0 : i32
    return %arg0, %c0_i32 : i32, i32
  }
  func.func @transform_1(%arg0: i32) -> (i32, i32) {
    %c0_i32 = arith.constant 0 : i32
    %c0_i32_0 = arith.constant 0 : i32
    %c0_i32_1 = arith.constant 0 : i32
    return %c0_i32, %c0_i32_0 : i32, i32
  }
  func.func @transform_2(%arg0: i32) -> (i32, i32) {
    %c0_i32 = arith.constant 0 : i32
    %c0_i32_0 = arith.constant 0 : i32
    %c0_i32_1 = arith.constant 0 : i32
    return %c0_i32, %c0_i32_0 : i32, i32
  }
  func.func @transform_3(%arg0: i32) -> (i32, i32) {
    %c0_i32 = arith.constant 0 : i32
    %c0_i32_0 = arith.constant 0 : i32
    return %arg0, %c0_i32 : i32, i32
  }
}

module attributes {stable_mosaic.version = 11 : i64} {
  func.func @_linear_kernel(%arg0: i32, %arg1: memref<16x32xbf16, #tpu.memory_space<vmem>>, %arg2: memref<32x32xbf16, #tpu.memory_space<vmem>>, %arg3: memref<1x32xf32, #tpu.memory_space<vmem>>, %arg4: memref<16x32xbf16, #tpu.memory_space<vmem>>) attributes {dimension_semantics = [#tpu.dimension_semantics<parallel>], iteration_bounds = array<i64: 1>, scalar_prefetch = 0 : i64, scratch_operands = 0 : i64, tpu.core_type = #tpu.core_type<tc>, window_params = [{transform_indices = @transform_0, window_bounds = array<i64: 16, 32>}, {pipeline_mode = #tpu.pipeline_mode<synchronous>, transform_indices = @transform_1, window_bounds = array<i64: 32, 32>}, {pipeline_mode = #tpu.pipeline_mode<synchronous>, transform_indices = @transform_2, window_bounds = array<i64: 1, 32>}, {transform_indices = @transform_3, window_bounds = array<i64: 16, 32>}]} {
    %c0 = arith.constant 0 : index
    %c0_0 = arith.constant 0 : index
    %0 = vector.load %arg1[%c0, %c0_0] : memref<16x32xbf16, #tpu.memory_space<vmem>>, vector<16x32xbf16>
    %c0_1 = arith.constant 0 : index
    %c0_2 = arith.constant 0 : index
    %1 = vector.load %arg2[%c0_1, %c0_2] : memref<32x32xbf16, #tpu.memory_space<vmem>>, vector<32x32xbf16>
    %cst = arith.constant dense<0.000000e+00> : vector<16x32xf32>
    %2 = tpu.matmul %0, %1, %cst {dimension_numbers = #tpu.dot_dimension_numbers<[1], [0], [0], [1], [0, 0, 1, 1], [], []>} : vector<16x32xbf16>, vector<32x32xbf16>, vector<16x32xf32> -> vector<16x32xf32>
    %c0_3 = arith.constant 0 : index
    %c0_4 = arith.constant 0 : index
    %3 = vector.load %arg3[%c0_3, %c0_4] : memref<1x32xf32, #tpu.memory_space<vmem>>, vector<1x32xf32>
    %4 = vector.broadcast %3 : vector<1x32xf32> to vector<16x32xf32>
    %5 = arith.addf %2, %4 : vector<16x32xf32>
    %6 = arith.truncf %5 : vector<16x32xf32> to vector<16x32xbf16>
    %c0_5 = arith.constant 0 : index
    %c0_6 = arith.constant 0 : index
    %7 = vector.load %arg4[%c0_5, %c0_6] : memref<16x32xbf16, #tpu.memory_space<vmem>>, vector<16x32xbf16>
    tpu.vector_store %arg4[%c0_5, %c0_6], %6 {strides = array<i32>} : memref<16x32xbf16, #tpu.memory_space<vmem>>, vector<16x32xbf16>,
    return
  }
  func.func @transform_0(%arg0: i32) -> (i32, i32) {
    %c0_i32 = arith.constant 0 : i32
    %c0_i32_0 = arith.constant 0 : i32
    return %arg0, %c0_i32 : i32, i32
  }
  func.func @transform_1(%arg0: i32) -> (i32, i32) {
    %c0_i32 = arith.constant 0 : i32
    %c0_i32_0 = arith.constant 0 : i32
    %c0_i32_1 = arith.constant 0 : i32
    return %c0_i32, %c0_i32_0 : i32, i32
  }
  func.func @transform_2(%arg0: i32) -> (i32, i32) {
    %c0_i32 = arith.constant 0 : i32
    %c0_i32_0 = arith.constant 0 : i32
    %c0_i32_1 = arith.constant 0 : i32
    return %c0_i32, %c0_i32_0 : i32, i32
  }
  func.func @transform_3(%arg0: i32) -> (i32, i32) {
    %c0_i32 = arith.constant 0 : i32
    %c0_i32_0 = arith.constant 0 : i32
    return %arg0, %c0_i32 : i32, i32
  }
}

</mosaic_0001>

<llo_original>
// kernel: tpu_custom_call.1
$region0: #{tpu_custom_call.1}
  #allocation0 [shape = 'u32[]', space=smem, size = 0x4, offset = 0x4, fixed_abs, tag = 'smem constant byte address 0x4 - core index']
  #allocation1 [shape = 'u32[144,128]{1,0:T(1,128)}', space=vmem, size = 0x12000, scoped, tag = 'internal scratch']
  %s0 = inlined_call_operand.hbm [shape: bf16[16,32], index: 0, kind: input, shape index: {}]
  %s1 = inlined_call_operand.hbm [shape: bf16[32,32], index: 1, kind: input, shape index: {}]
  %s2 = inlined_call_operand.vmem [shape: f32[1,32], index: 2, kind: input, shape index: {}]
  %s3 = inlined_call_operand.hbm [shape: bf16[16,32], index: 3, kind: output, shape index: {}]
  %s4 = sld [smem:[#allocation0]]
  $region30: #{tpu_custom_call.1} parent=0
    _
  %s6 = ssub.s32 1, %s4
  %s7 = scalar_select 0, %s6, %s4
  $region1: #{tpu_custom_call.1} parent=0
    #allocation2 [shape = 'u8[4096]{0}', space=vmem, size = 0x1000, scoped, tag = 'input window, operand 0, single buffered']
    #allocation3 [shape = 's32[1]{0}', space=sflag, size = 0x4, scoped, tag = 'scoped memory for tpu_custom_call.1']
    #allocation4 [shape = 's32[1]{0}', space=sflag, size = 0x4, scoped, tag = 'scoped memory for tpu_custom_call.1']
    #allocation5 [shape = 'u8[8192]{0}', space=vmem, size = 0x2000, scoped, tag = 'input window, operand 1, single buffered']
    #allocation6 [shape = 's32[1]{0}', space=sflag, size = 0x4, scoped, tag = 'scoped memory for tpu_custom_call.1']
    #allocation7 [shape = 'u8[4096]{0}', space=vmem, size = 0x1000, scoped, tag = 'output window, operand 0, single buffered']
    %8 = vsyncpa [#allocation3], 0
    %9 = vsyncpa [#allocation6], 0
    %10 = vsyncpa [#allocation4], 0
    // Predicated region
    $region2: #{tpu_custom_call.1} parent=1 // pred_check
      _
    $region3: #{tpu_custom_call.1} parent=1 // pred_check_branch
      %12 = sbr.rel (0) target = $region5
    $region4: #{tpu_custom_call.1} parent=1 // pred_region
      %s14 = ssub.s32 128, 128
      %15 = vsyncadd [#allocation3], %s14
      %s16 = sshll.u32 [#allocation2], 4
      %s17 = int_to_ptr.vmem [resolvable:$true] %s16
      %22 = dma.hbm_to_vmem [thread:$0]  %s0, 128, %s17, [#allocation3], 64, 64, 4
    $region5: #{tpu_custom_call.1} parent=1 // pred_fallthru
      _
    // Predicated region
    $region6: #{tpu_custom_call.1} parent=1 // pred_check
      _
    $region7: #{tpu_custom_call.1} parent=1 // pred_check_branch
      %24 = sbr.rel (0) target = $region9
    $region8: #{tpu_custom_call.1} parent=1 // pred_region
      %s26 = ssub.s32 256, 256
      %27 = vsyncadd [#allocation6], %s26
      %s28 = sshll.u32 [#allocation5], 4
      %s29 = int_to_ptr.vmem [resolvable:$true] %s28
      %34 = dma.hbm_to_vmem [thread:$0]  %s1, 256, %s29, [#allocation6], 64, 64, 4
    $region9: #{tpu_custom_call.1} parent=1 // pred_fallthru
      _
    // Predicated region
    $region10: #{tpu_custom_call.1} parent=1 // pred_check
      _
    $region11: #{tpu_custom_call.1} parent=1 // pred_check_branch
      %36 = sbr.rel (0) target = $region13
    $region12: #{tpu_custom_call.1} parent=1 // pred_region
      _
    $region13: #{tpu_custom_call.1} parent=1 // pred_fallthru
      _
    // Predicated region
    $region14: #{tpu_custom_call.1} parent=1 // pred_check
      _
    $region15: #{tpu_custom_call.1} parent=1 // pred_check_branch
      %38 = sbr.rel (0) target = $region17
    $region16: #{tpu_custom_call.1} parent=1 // pred_region
      %39 = dma.done [#allocation3], 128
    $region17: #{tpu_custom_call.1} parent=1 // pred_fallthru
      _
    // Predicated region
    $region18: #{tpu_custom_call.1} parent=1 // pred_check
      _
    $region19: #{tpu_custom_call.1} parent=1 // pred_check_branch
      %41 = sbr.rel (0) target = $region21
    $region20: #{tpu_custom_call.1} parent=1 // pred_region
      %42 = dma.done [#allocation6], 256
    $region21: #{tpu_custom_call.1} parent=1 // pred_fallthru
      _
    %v44 = vld [vmem:[#allocation2] sm:$0xf]
    %v45 = vld [vmem:[#allocation2 + $0x4] sm:$0xf]
    %v46 = vld [vmem:[#allocation5] sm:$0xf]
    %v47 = vld [vmem:[#allocation5 + $0x4] sm:$0xf]
    %v48 = vld [vmem:[#allocation5 + $0x8] sm:$0xf]
    %v49 = vld [vmem:[#allocation5 + $0xc] sm:$0xf]
    %v50 = vld [vmem:[%s2] sm:$0x1]
    %v52 = vlaneseq
    %v53 = vshrl.u32 %v52, 7
    %v54 = vsub.s32 0, %v53
    %v55 = vrot.slane %v50, %v54
    %v59 = vunpack.c.l.b16 %v44
    %v60 = vunpack.c.l.b16 %v45
    %v61 = vpack.c.b16 %v60, %v59
    %v66 = vunpack.c.l.b16 %v46
    %v67 = vunpack.c.l.b16 %v47
    %v68 = vunpack.c.l.b16 %v48
    %v69 = vunpack.c.l.b16 %v49
    %v70 = vpack.c.b16 %v67, %v66
    %v71 = vpack.c.b16 %v69, %v68
    %vm74 = vcmask 261120
    %v76 = vsel %vm74, %v61, 0
    %78 = vmatprep.subr.bf16.mxu0 0
    %79 = vmatpush1.bf16.msra.mxu0 %v70
    %80 = vmatprep.subr.bf16.mxu0 0
    %81 = vmatpush1.bf16.msra.mxu0 %v71
    %82 = vmatprep.subr.bf16.mxu0 0
    %83 = vmatpush1.bf16.msra.mxu0 0
    %84 = vmatprep.subr.bf16.mxu0 0
    %85 = vmatpush1.bf16.msra.mxu0 0
    %86 = vmatprep.subr.bf16.mxu0 0
    %87 = vmatpush1.bf16.msra.mxu0 0
    %88 = vmatprep.subr.bf16.mxu0 0
    %89 = vmatpush1.bf16.msra.mxu0 0
    %90 = vmatprep.subr.bf16.mxu0 0
    %91 = vmatpush1.bf16.msra.mxu0 0
    %92 = vmatprep.subr.bf16.mxu0 0
    %93 = vmatpush1.bf16.msra.mxu0 0
    %94 = vmatprep.subr.bf16.mxu0 0
    %95 = vmatpush1.bf16.msra.mxu0 0
    %96 = vmatprep.subr.bf16.mxu0 0
    %97 = vmatpush1.bf16.msra.mxu0 0
    %98 = vmatprep.subr.bf16.mxu0 0
    %99 = vmatpush1.bf16.msra.mxu0 0
    %100 = vmatprep.subr.bf16.mxu0 0
    %101 = vmatpush1.bf16.msra.mxu0 0
    %102 = vmatprep.subr.bf16.mxu0 0
    %103 = vmatpush1.bf16.msra.mxu0 0
    %104 = vmatprep.subr.bf16.mxu0 0
    %105 = vmatpush1.bf16.msra.mxu0 0
    %106 = vmatprep.subr.bf16.mxu0 0
    %107 = vmatpush1.bf16.msra.mxu0 0
    %108 = vmatprep.subr.bf16.mxu0 0
    %109 = vmatpush1.bf16.msra.mxu0 0
    %110 = vmatprep.mubr.bf16.mxu0 0
    %111 = vmatmul.mubr.bf16.gmra.mrb[0].mxu0 %v76
    %v112 = vpop.f32.mrb[0].mxu0
    %v113 = vadd.f32 %v55, %v112
    %v114 = vpop.f32.mrb[0].mxu0
    %v115 = vpop.f32.mrb[0].mxu0
    %v116 = vadd.f32 %v55, %v115
    %v117 = vpop.f32.mrb[0].mxu0
    %118 = vdwg.mxu0
    %v119 = vpack.c.bf16 %v116, %v113
    %v121 = vunpack.c.l.b16 %v119
    %v122 = vunpack.c.h.b16 %v119
    %v123 = vpack.c.b16 %v121, %v121
    %v124 = vpack.c.b16 %v122, %v122
    %vm127 = vcmask 257024
    %128 = vst.msk [vmem:[#allocation7] sm:$0xf] %vm127, %v123
    %129 = vst.msk [vmem:[#allocation7 + $0x4] sm:$0xf] %vm127, %v124
    // Predicated region
    $region22: #{tpu_custom_call.1} parent=1 // pred_check
      _
    $region23: #{tpu_custom_call.1} parent=1 // pred_check_branch
      %131 = sbr.rel (0) target = $region25
    $region24: #{tpu_custom_call.1} parent=1 // pred_region
      %s133 = ssub.s32 128, 128
      %134 = vsyncadd [#allocation4], %s133
      %s135 = sshll.u32 [#allocation7], 4
      %s136 = int_to_ptr.vmem [resolvable:$true] %s135
      %141 = dma.vmem_to_hbm [thread:$0]  %s136, 128, %s3, [#allocation4], 64, 64, 4
    $region25: #{tpu_custom_call.1} parent=1 // pred_fallthru
      _
    // Predicated region
    $region26: #{tpu_custom_call.1} parent=1 // pred_check
      _
    $region27: #{tpu_custom_call.1} parent=1 // pred_check_branch
      %143 = sbr.rel (0) target = $region29
    $region28: #{tpu_custom_call.1} parent=1 // pred_region
      %144 = dma.done [#allocation4], 128
    $region29: #{tpu_custom_call.1} parent=1 // pred_fallthru
      _
    %145 = vsyncpa [#allocation3], 1
    %146 = vsyncpa [#allocation6], 1
    %147 = vsyncpa [#allocation4], 1

// kernel: tpu_custom_call.1
$region0: #{tpu_custom_call.1}
  #allocation0 [shape = 'u32[]', space=smem, size = 0x4, offset = 0x4, fixed_abs, tag = 'smem constant byte address 0x4 - core index']
  #allocation1 [shape = 'u32[144,128]{1,0:T(1,128)}', space=vmem, size = 0x12000, scoped, tag = 'internal scratch']
  %s0 = inlined_call_operand.hbm [shape: bf16[16,32], index: 0, kind: input, shape index: {}]
  %s1 = inlined_call_operand.hbm [shape: bf16[32,32], index: 1, kind: input, shape index: {}]
  %s2 = inlined_call_operand.vmem [shape: f32[1,32], index: 2, kind: input, shape index: {}]
  %s3 = inlined_call_operand.hbm [shape: bf16[16,32], index: 3, kind: output, shape index: {}]
  %s4 = sld [smem:[#allocation0]]
  $region30: #{tpu_custom_call.1} parent=0
    _
  %s6 = ssub.s32 1, %s4
  %s7 = scalar_select 0, %s6, %s4
  $region1: #{tpu_custom_call.1} parent=0
    #allocation2 [shape = 'u8[4096]{0}', space=vmem, size = 0x1000, scoped, tag = 'input window, operand 0, single buffered']
    #allocation3 [shape = 's32[1]{0}', space=sflag, size = 0x4, scoped, tag = 'scoped memory for tpu_custom_call.1']
    #allocation4 [shape = 's32[1]{0}', space=sflag, size = 0x4, scoped, tag = 'scoped memory for tpu_custom_call.1']
    #allocation5 [shape = 'u8[8192]{0}', space=vmem, size = 0x2000, scoped, tag = 'input window, operand 1, single buffered']
    #allocation6 [shape = 's32[1]{0}', space=sflag, size = 0x4, scoped, tag = 'scoped memory for tpu_custom_call.1']
    #allocation7 [shape = 'u8[4096]{0}', space=vmem, size = 0x1000, scoped, tag = 'output window, operand 0, single buffered']
    %8 = vsyncpa [#allocation3], 0
    %9 = vsyncpa [#allocation6], 0
    %10 = vsyncpa [#allocation4], 0
    // Predicated region
    $region2: #{tpu_custom_call.1} parent=1 // pred_check
      _
    $region3: #{tpu_custom_call.1} parent=1 // pred_check_branch
      %12 = sbr.rel (0) target = $region5
    $region4: #{tpu_custom_call.1} parent=1 // pred_region
      %s14 = ssub.s32 128, 128
      %15 = vsyncadd [#allocation3], %s14
      %s16 = sshll.u32 [#allocation2], 4
      %s17 = int_to_ptr.vmem [resolvable:$true] %s16
      %22 = dma.hbm_to_vmem [thread:$0]  %s0, 128, %s17, [#allocation3], 64, 64, 4
    $region5: #{tpu_custom_call.1} parent=1 // pred_fallthru
      _
    // Predicated region
    $region6: #{tpu_custom_call.1} parent=1 // pred_check
      _
    $region7: #{tpu_custom_call.1} parent=1 // pred_check_branch
      %24 = sbr.rel (0) target = $region9
    $region8: #{tpu_custom_call.1} parent=1 // pred_region
      %s26 = ssub.s32 256, 256
      %27 = vsyncadd [#allocation6], %s26
      %s28 = sshll.u32 [#allocation5], 4
      %s29 = int_to_ptr.vmem [resolvable:$true] %s28
      %34 = dma.hbm_to_vmem [thread:$0]  %s1, 256, %s29, [#allocation6], 64, 64, 4
    $region9: #{tpu_custom_call.1} parent=1 // pred_fallthru
      _
    // Predicated region
    $region10: #{tpu_custom_call.1} parent=1 // pred_check
      _
    $region11: #{tpu_custom_call.1} parent=1 // pred_check_branch
      %36 = sbr.rel (0) target = $region13
    $region12: #{tpu_custom_call.1} parent=1 // pred_region
      _
    $region13: #{tpu_custom_call.1} parent=1 // pred_fallthru
      _
    // Predicated region
    $region14: #{tpu_custom_call.1} parent=1 // pred_check
      _
    $region15: #{tpu_custom_call.1} parent=1 // pred_check_branch
      %38 = sbr.rel (0) target = $region17
    $region16: #{tpu_custom_call.1} parent=1 // pred_region
      %39 = dma.done [#allocation3], 128
    $region17: #{tpu_custom_call.1} parent=1 // pred_fallthru
      _
    // Predicated region
    $region18: #{tpu_custom_call.1} parent=1 // pred_check
      _
    $region19: #{tpu_custom_call.1} parent=1 // pred_check_branch
      %41 = sbr.rel (0) target = $region21
    $region20: #{tpu_custom_call.1} parent=1 // pred_region
      %42 = dma.done [#allocation6], 256
    $region21: #{tpu_custom_call.1} parent=1 // pred_fallthru
      _
    %v44 = vld [vmem:[#allocation2] sm:$0xf]
    %v45 = vld [vmem:[#allocation2 + $0x4] sm:$0xf]
    %v46 = vld [vmem:[#allocation5] sm:$0xf]
    %v47 = vld [vmem:[#allocation5 + $0x4] sm:$0xf]
    %v48 = vld [vmem:[#allocation5 + $0x8] sm:$0xf]
    %v49 = vld [vmem:[#allocation5 + $0xc] sm:$0xf]
    %v50 = vld [vmem:[%s2] sm:$0x1]
    %v52 = vlaneseq
    %v53 = vshrl.u32 %v52, 7
    %v54 = vsub.s32 0, %v53
    %v55 = vrot.slane %v50, %v54
    %v59 = vunpack.c.l.b16 %v44
    %v60 = vunpack.c.l.b16 %v45
    %v61 = vpack.c.b16 %v60, %v59
    %v66 = vunpack.c.l.b16 %v46
    %v67 = vunpack.c.l.b16 %v47
    %v68 = vunpack.c.l.b16 %v48
    %v69 = vunpack.c.l.b16 %v49
    %v70 = vpack.c.b16 %v67, %v66
    %v71 = vpack.c.b16 %v69, %v68
    %vm74 = vcmask 261120
    %v76 = vsel %vm74, %v61, 0
    %78 = vmatprep.subr.bf16.mxu0 0
    %79 = vmatpush1.bf16.msra.mxu0 %v70
    %80 = vmatprep.subr.bf16.mxu0 0
    %81 = vmatpush1.bf16.msra.mxu0 %v71
    %82 = vmatprep.subr.bf16.mxu0 0
    %83 = vmatpush1.bf16.msra.mxu0 0
    %84 = vmatprep.subr.bf16.mxu0 0
    %85 = vmatpush1.bf16.msra.mxu0 0
    %86 = vmatprep.subr.bf16.mxu0 0
    %87 = vmatpush1.bf16.msra.mxu0 0
    %88 = vmatprep.subr.bf16.mxu0 0
    %89 = vmatpush1.bf16.msra.mxu0 0
    %90 = vmatprep.subr.bf16.mxu0 0
    %91 = vmatpush1.bf16.msra.mxu0 0
    %92 = vmatprep.subr.bf16.mxu0 0
    %93 = vmatpush1.bf16.msra.mxu0 0
    %94 = vmatprep.subr.bf16.mxu0 0
    %95 = vmatpush1.bf16.msra.mxu0 0
    %96 = vmatprep.subr.bf16.mxu0 0
    %97 = vmatpush1.bf16.msra.mxu0 0
    %98 = vmatprep.subr.bf16.mxu0 0
    %99 = vmatpush1.bf16.msra.mxu0 0
    %100 = vmatprep.subr.bf16.mxu0 0
    %101 = vmatpush1.bf16.msra.mxu0 0
    %102 = vmatprep.subr.bf16.mxu0 0
    %103 = vmatpush1.bf16.msra.mxu0 0
    %104 = vmatprep.subr.bf16.mxu0 0
    %105 = vmatpush1.bf16.msra.mxu0 0
    %106 = vmatprep.subr.bf16.mxu0 0
    %107 = vmatpush1.bf16.msra.mxu0 0
    %108 = vmatprep.subr.bf16.mxu0 0
    %109 = vmatpush1.bf16.msra.mxu0 0
    %110 = vmatprep.mubr.bf16.mxu0 0
    %111 = vmatmul.mubr.bf16.gmra.mrb[0].mxu0 %v76
    %v112 = vpop.f32.mrb[0].mxu0
    %v113 = vadd.f32 %v55, %v112
    %v114 = vpop.f32.mrb[0].mxu0
    %v115 = vpop.f32.mrb[0].mxu0
    %v116 = vadd.f32 %v55, %v115
    %v117 = vpop.f32.mrb[0].mxu0
    %118 = vdwg.mxu0
    %v119 = vpack.c.bf16 %v116, %v113
    %v121 = vunpack.c.l.b16 %v119
    %v122 = vunpack.c.h.b16 %v119
    %v123 = vpack.c.b16 %v121, %v121
    %v124 = vpack.c.b16 %v122, %v122
    %vm127 = vcmask 257024
    %128 = vst.msk [vmem:[#allocation7] sm:$0xf] %vm127, %v123
    %129 = vst.msk [vmem:[#allocation7 + $0x4] sm:$0xf] %vm127, %v124
    // Predicated region
    $region22: #{tpu_custom_call.1} parent=1 // pred_check
      _
    $region23: #{tpu_custom_call.1} parent=1 // pred_check_branch
      %131 = sbr.rel (0) target = $region25
    $region24: #{tpu_custom_call.1} parent=1 // pred_region
      %s133 = ssub.s32 128, 128
      %134 = vsyncadd [#allocation4], %s133
      %s135 = sshll.u32 [#allocation7], 4
      %s136 = int_to_ptr.vmem [resolvable:$true] %s135
      %141 = dma.vmem_to_hbm [thread:$0]  %s136, 128, %s3, [#allocation4], 64, 64, 4
    $region25: #{tpu_custom_call.1} parent=1 // pred_fallthru
      _
    // Predicated region
    $region26: #{tpu_custom_call.1} parent=1 // pred_check
      _
    $region27: #{tpu_custom_call.1} parent=1 // pred_check_branch
      %143 = sbr.rel (0) target = $region29
    $region28: #{tpu_custom_call.1} parent=1 // pred_region
      %144 = dma.done [#allocation4], 128
    $region29: #{tpu_custom_call.1} parent=1 // pred_fallthru
      _
    %145 = vsyncpa [#allocation3], 1
    %146 = vsyncpa [#allocation6], 1
    %147 = vsyncpa [#allocation4], 1

</llo_original>
